<compile_context>
chip_gen: v7x
topology: tpu7x:2x2x1
jax: 0.10.0
libtpu: 0.0.40
codegen_flags: <defaults>
</compile_context>

<pallas_src>
import math

import jax
import jax.numpy as jnp
from jax.experimental import pallas as pl
from jax.experimental.pallas import tpu as pltpu


def _round_up(x, m):
    return ((x + m - 1) // m) * m


def _make_gcn_kernel(reassociate, has_bias):
    """Build a kernel body.

    Grid = (row tiles i, contraction tiles k); k is the reduction axis.
    Refs: x(tk, in_f), w(in_f, out_f), adj(tm, tk) [, bias(1, out_f)],
          out(tm, out_f), acc scratch (tm, in_f|out_f) f32.
    """

    def kernel(*refs):
        if has_bias:
            x_ref, w_ref, adj_ref, b_ref, o_ref, acc_ref = refs
        else:
            x_ref, w_ref, adj_ref, o_ref, acc_ref = refs
            b_ref = None

        k = pl.program_id(1)

        @pl.when(k == 0)
        def _init():
            acc_ref[...] = jnp.zeros_like(acc_ref)

        if reassociate:
            # acc(tm, in_f) += adj[i, k] @ X[k]          (bf16 MXU, f32 acc)
            acc_ref[...] += jnp.dot(
                adj_ref[...], x_ref[...], preferred_element_type=jnp.float32)
        else:
            # acc(tm, out_f) += adj[i, k] @ (X[k] @ W)   (bf16 MXU, f32 acc)
            support = jnp.dot(
                x_ref[...], w_ref[...], preferred_element_type=jnp.float32)
            acc_ref[...] += jnp.dot(
                adj_ref[...], support.astype(jnp.bfloat16),
                preferred_element_type=jnp.float32)

        @pl.when(k == pl.num_programs(1) - 1)
        def _finalize():
            if reassociate:
                out = jnp.dot(
                    acc_ref[...].astype(jnp.bfloat16), w_ref[...],
                    preferred_element_type=jnp.float32)
            else:
                out = acc_ref[...]
            if b_ref is not None:
                out = out + b_ref[...]        # (1, out_f) broadcast over rows
            o_ref[...] = jnp.maximum(out, 0.0).astype(o_ref.dtype)

    return kernel


def graph_convolution(x, adj, weight, bias=None, *, tm=256, tk=512):
    """Pallas GCN forward: relu(adj @ (x @ weight) + bias).

    tm: adjacency row tile (multiple of 8); tk: contraction tile (multiple of
    128).  Sweep per TPU generation (v5e/v6e can afford ~2x the v7x footprint).
    """
    n, in_f = x.shape
    in_f2, out_f = weight.shape
    assert in_f == in_f2, (in_f, in_f2)
    assert adj.shape == (n, n), adj.shape

    has_bias = bias is not None
    # Contract the N^2-sized matmul over the smaller feature dimension.
    reassociate = in_f <= out_f

    # bf16 MXU inputs, f32 accumulation.  Epilogue (bias/ReLU) stays f32.
    xb = x.astype(jnp.bfloat16)
    ab = adj.astype(jnp.bfloat16)
    wb = weight.astype(jnp.bfloat16)

    if n <= max(tm, tk):
        # Small / moderate graph: one row tile, one contraction tile.
        # Full-array blocks are always layout-legal (block shape == array dims).
        tm_e = tk_e = n_pad = n
    else:
        tm_e, tk_e = tm, tk
        assert tm_e % 8 == 0 and tk_e % 128 == 0, (tm_e, tk_e)
        n_pad = _round_up(n, math.lcm(tm_e, tk_e))

    if n_pad != n:
        # Zero-padded adjacency columns contribute nothing; padded output rows
        # are sliced off below.
        xb = jnp.pad(xb, ((0, n_pad - n), (0, 0)))
        ab = jnp.pad(ab, ((0, n_pad - n), (0, n_pad - n)))

    grid = (n_pad // tm_e, n_pad // tk_e)
    acc_f = in_f if reassociate else out_f

    in_specs = [
        pl.BlockSpec((tk_e, in_f), lambda i, k: (k, 0)),      # x panel
        pl.BlockSpec((in_f, out_f), lambda i, k: (0, 0)),     # weight (resident)
        pl.BlockSpec((tm_e, tk_e), lambda i, k: (i, k)),      # adj tile
    ]
    inputs = [xb, wb, ab]
    if has_bias:
        in_specs.append(pl.BlockSpec((1, out_f), lambda i, k: (0, 0)))
        inputs.append(bias.reshape(1, out_f).astype(jnp.float32))

    out = pl.pallas_call(
        _make_gcn_kernel(reassociate, has_bias),
        out_shape=jax.ShapeDtypeStruct((n_pad, out_f), jnp.float32),
        grid_spec=pltpu.PrefetchScalarGridSpec(
            num_scalar_prefetch=0,
            grid=grid,
            in_specs=in_specs,
            out_specs=pl.BlockSpec((tm_e, out_f), lambda i, k: (i, 0)),
            scratch_shapes=[pltpu.VMEM((tm_e, acc_f), jnp.float32)],
        ),
        compiler_params=pltpu.CompilerParams(
            dimension_semantics=("parallel", "arbitrary")),
    )(*inputs)

    if n_pad != n:
        out = out[:n]
    return out


def init_params(key, in_features, out_features, bias=True):
    """Matches reset_parameters(): U(-stdv, stdv), stdv = 1/sqrt(out_features)."""
    stdv = 1.0 / math.sqrt(out_features)
    kw, kb = jax.random.split(key)
    weight = jax.random.uniform(
        kw, (in_features, out_features), jnp.float32, minval=-stdv, maxval=stdv)
    b = None
    if bias:
        b = jax.random.uniform(
            kb, (out_features,), jnp.float32, minval=-stdv, maxval=stdv)
    return weight, b


if __name__ == "__main__":
    key = jax.random.PRNGKey(0)
    k_x, k_adj, k_param = jax.random.split(key, 3)

    # --- small demo matching the module's intended use -----------------------
    N, IN_F, OUT_F = 8, 16, 32

    x = jax.random.normal(k_x, (N, IN_F), dtype=jnp.float32)
    a_raw = (jax.random.uniform(k_adj, (N, N)) > 0.5).astype(jnp.float32)
    adj = a_raw + a_raw.T + jnp.eye(N, dtype=jnp.float32)
    adj = adj / jnp.sum(adj, axis=1, keepdims=True)

    weight, bias = init_params(k_param, IN_F, OUT_F, bias=True)

    out = graph_convolution(x, adj, weight, bias)
    out = jax.block_until_ready(out)

    ref = jnp.maximum(adj @ (x @ weight) + bias[None, :], 0.0)
    assert out.shape == (N, OUT_F)
    # bf16 MXU inputs + reassociated matmul => loosened tolerance (f32 ref).
    assert jnp.allclose(out, ref, atol=3e-2, rtol=3e-2)

    # --- larger, non-divisible graph: exercises tiling, padding, no-bias path,
    #     and the adj @ (X @ W) association (out_f < in_f) ---------------------
    N2, IN2, OUT2 = 640, 64, 32
    k_x2, k_adj2, k_p2 = jax.random.split(jax.random.PRNGKey(0), 3)
    x2 = jax.random.normal(k_x2, (N2, IN2), dtype=jnp.float32)
    a2 = (jax.random.uniform(k_adj2, (N2, N2)) > 0.9).astype(jnp.float32)
    adj2 = a2 + a2.T + jnp.eye(N2, dtype=jnp.float32)
    adj2 = adj2 / jnp.sum(adj2, axis=1, keepdims=True)
    w2, _ = init_params(k_p2, IN2, OUT2, bias=False)

    out2 = graph_convolution(x2, adj2, w2, None)
    out2 = jax.block_until_ready(out2)
    ref2 = jnp.maximum(adj2 @ (x2 @ w2), 0.0)
    assert out2.shape == (N2, OUT2)
    assert jnp.allclose(out2, ref2, atol=3e-2, rtol=3e-2)

    print("KERNEL_OK")
</pallas_src>

<mosaic_0001>
module attributes {stable_mosaic.version = 11 : i64} {
  func.func @kernel(%arg0: i32, %arg1: i32, %arg2: memref<8x16xbf16, #tpu.memory_space<vmem>>, %arg3: memref<16x32xbf16, #tpu.memory_space<vmem>>, %arg4: memref<8x8xbf16, #tpu.memory_space<vmem>>, %arg5: memref<1x32xf32, #tpu.memory_space<vmem>>, %arg6: memref<8x32xf32, #tpu.memory_space<vmem>>, %arg7: memref<8x16xf32, #tpu.memory_space<vmem>>) attributes {dimension_semantics = [#tpu.dimension_semantics<parallel>, #tpu.dimension_semantics<arbitrary>], iteration_bounds = array<i64: 1, 1>, scalar_prefetch = 0 : i64, scratch_operands = 1 : i64, tpu.core_type = #tpu.core_type<tc>, window_params = [{transform_indices = @transform_0, window_bounds = array<i64: 8, 16>}, {pipeline_mode = #tpu.pipeline_mode<synchronous>, transform_indices = @transform_1, window_bounds = array<i64: 16, 32>}, {transform_indices = @transform_2, window_bounds = array<i64: 8, 8>}, {pipeline_mode = #tpu.pipeline_mode<synchronous>, transform_indices = @transform_3, window_bounds = array<i64: 1, 32>}, {transform_indices = @transform_4, window_bounds = array<i64: 8, 32>}]} {
    %c0_i32 = arith.constant 0 : i32
    %0 = arith.cmpi eq, %arg1, %c0_i32 : i32
    %1 = arith.extui %0 : i1 to i32
    %c0_i32_0 = arith.constant 0 : i32
    %2 = arith.cmpi ne, %1, %c0_i32_0 : i32
    scf.if %2 {
      %cst_10 = arith.constant 0.000000e+00 : f32
      %12 = vector.broadcast %cst_10 : f32 to vector<8x16xf32>
      %c0_11 = arith.constant 0 : index
      %c0_12 = arith.constant 0 : index
      %13 = vector.load %arg7[%c0_11, %c0_12] : memref<8x16xf32, #tpu.memory_space<vmem>>, vector<8x16xf32>
      tpu.vector_store %arg7[%c0_11, %c0_12], %12 {strides = array<i32>} : memref<8x16xf32, #tpu.memory_space<vmem>>, vector<8x16xf32>,
    } else {
    }
    %c0 = arith.constant 0 : index
    %c0_1 = arith.constant 0 : index
    %3 = vector.load %arg7[%c0, %c0_1] : memref<8x16xf32, #tpu.memory_space<vmem>>, vector<8x16xf32>
    %c0_2 = arith.constant 0 : index
    %c0_3 = arith.constant 0 : index
    %4 = vector.load %arg4[%c0_2, %c0_3] : memref<8x8xbf16, #tpu.memory_space<vmem>>, vector<8x8xbf16>
    %c0_4 = arith.constant 0 : index
    %c0_5 = arith.constant 0 : index
    %5 = vector.load %arg2[%c0_4, %c0_5] : memref<8x16xbf16, #tpu.memory_space<vmem>>, vector<8x16xbf16>
    %cst = arith.constant dense<0.000000e+00> : vector<8x16xf32>
    %6 = tpu.matmul %4, %5, %cst {dimension_numbers = #tpu.dot_dimension_numbers<[1], [0], [0], [1], [0, 0, 1, 1], [], []>} : vector<8x8xbf16>, vector<8x16xbf16>, vector<8x16xf32> -> vector<8x16xf32>
    %7 = arith.addf %3, %6 : vector<8x16xf32>
    %c0_6 = arith.constant 0 : index
    %c0_7 = arith.constant 0 : index
    %8 = vector.load %arg7[%c0_6, %c0_7] : memref<8x16xf32, #tpu.memory_space<vmem>>, vector<8x16xf32>
    tpu.vector_store %arg7[%c0_6, %c0_7], %7 {strides = array<i32>} : memref<8x16xf32, #tpu.memory_space<vmem>>, vector<8x16xf32>,
    %c0_i32_8 = arith.constant 0 : i32
    %9 = arith.cmpi eq, %arg1, %c0_i32_8 : i32
    %10 = arith.extui %9 : i1 to i32
    %c0_i32_9 = arith.constant 0 : i32
    %11 = arith.cmpi ne, %10, %c0_i32_9 : i32
    scf.if %11 {
      %c0_10 = arith.constant 0 : index
      %c0_11 = arith.constant 0 : index
      %12 = vector.load %arg7[%c0_10, %c0_11] : memref<8x16xf32, #tpu.memory_space<vmem>>, vector<8x16xf32>
      %13 = arith.truncf %12 : vector<8x16xf32> to vector<8x16xbf16>
      %c0_12 = arith.constant 0 : index
      %c0_13 = arith.constant 0 : index
      %14 = vector.load %arg3[%c0_12, %c0_13] : memref<16x32xbf16, #tpu.memory_space<vmem>>, vector<16x32xbf16>
      %cst_14 = arith.constant dense<0.000000e+00> : vector<8x32xf32>
      %15 = tpu.matmul %13, %14, %cst_14 {dimension_numbers = #tpu.dot_dimension_numbers<[1], [0], [0], [1], [0, 0, 1, 1], [], []>} : vector<8x16xbf16>, vector<16x32xbf16>, vector<8x32xf32> -> vector<8x32xf32>
      %c0_15 = arith.constant 0 : index
      %c0_16 = arith.constant 0 : index
      %16 = vector.load %arg5[%c0_15, %c0_16] : memref<1x32xf32, #tpu.memory_space<vmem>>, vector<1x32xf32>
      %17 = vector.broadcast %16 : vector<1x32xf32> to vector<8x32xf32>
      %18 = arith.addf %15, %17 : vector<8x32xf32>
      %cst_17 = arith.constant 0.000000e+00 : f32
      %19 = vector.broadcast %cst_17 : f32 to vector<8x32xf32>
      %20 = arith.maximumf %18, %19 : vector<8x32xf32>
      %c0_18 = arith.constant 0 : index
      %c0_19 = arith.constant 0 : index
      %21 = vector.load %arg6[%c0_18, %c0_19] : memref<8x32xf32, #tpu.memory_space<vmem>>, vector<8x32xf32>
      tpu.vector_store %arg6[%c0_18, %c0_19], %20 {strides = array<i32>} : memref<8x32xf32, #tpu.memory_space<vmem>>, vector<8x32xf32>,
    } else {
    }
    return
  }
  func.func @transform_0(%arg0: i32, %arg1: i32) -> (i32, i32) {
    %c0_i32 = arith.constant 0 : i32
    %c0_i32_0 = arith.constant 0 : i32
    return %arg1, %c0_i32 : i32, i32
  }
  func.func @transform_1(%arg0: i32, %arg1: i32) -> (i32, i32) {
    %c0_i32 = arith.constant 0 : i32
    %c0_i32_0 = arith.constant 0 : i32
    %c0_i32_1 = arith.constant 0 : i32
    return %c0_i32, %c0_i32_0 : i32, i32
  }
  func.func @transform_2(%arg0: i32, %arg1: i32) -> (i32, i32) {
    %c0_i32 = arith.constant 0 : i32
    return %arg0, %arg1 : i32, i32
  }
  func.func @transform_3(%arg0: i32, %arg1: i32) -> (i32, i32) {
    %c0_i32 = arith.constant 0 : i32
    %c0_i32_0 = arith.constant 0 : i32
    %c0_i32_1 = arith.constant 0 : i32
    return %c0_i32, %c0_i32_0 : i32, i32
  }
  func.func @transform_4(%arg0: i32, %arg1: i32) -> (i32, i32) {
    %c0_i32 = arith.constant 0 : i32
    %c0_i32_0 = arith.constant 0 : i32
    return %arg0, %c0_i32 : i32, i32
  }
}

</mosaic_0001>

<llo_original>
// kernel: tpu_custom_call.1
$region0: #{tpu_custom_call.1}
  #allocation0 [shape = 'u32[]', space=smem, size = 0x4, offset = 0x4, fixed_abs, tag = 'smem constant byte address 0x4 - core index']
  #allocation1 [shape = 'u32[144,128]{1,0:T(1,128)}', space=vmem, size = 0x12000, scoped, tag = 'internal scratch']
  #allocation2 [shape = 'f32[8,16]{1,0:T(8,128)}', space=vmem, size = 0x1000, scoped, tag = 'scratch operand']
  %s0 = inlined_call_operand.hbm [shape: bf16[8,16], index: 0, kind: input, shape index: {}]
  %s1 = inlined_call_operand.hbm [shape: bf16[16,32], index: 1, kind: input, shape index: {}]
  %s2 = inlined_call_operand.vmem [shape: bf16[8,8], index: 2, kind: input, shape index: {}]
  %s3 = inlined_call_operand.vmem [shape: f32[1,32], index: 3, kind: input, shape index: {}]
  %s4 = inlined_call_operand.hbm [shape: f32[8,32], index: 4, kind: output, shape index: {}]
  %s5 = sld [smem:[#allocation0]]
  $region42: #{tpu_custom_call.1} parent=0
    _
  %s7 = ssub.s32 1, %s5
  %s8 = scalar_select 0, %s7, %s5
  $region1: #{tpu_custom_call.1} parent=0
    #allocation3 [shape = 'u8[2048]{0}', space=vmem, size = 0x800, scoped, tag = 'input window, operand 0, single buffered']
    #allocation4 [shape = 's32[1]{0}', space=sflag, size = 0x4, scoped, tag = 'scoped memory for tpu_custom_call.1']
    #allocation5 [shape = 's32[1]{0}', space=sflag, size = 0x4, scoped, tag = 'scoped memory for tpu_custom_call.1']
    #allocation6 [shape = 'u8[4096]{0}', space=vmem, size = 0x1000, scoped, tag = 'input window, operand 1, single buffered']
    #allocation7 [shape = 's32[1]{0}', space=sflag, size = 0x4, scoped, tag = 'scoped memory for tpu_custom_call.1']
    #allocation8 [shape = 'u8[4096]{0}', space=vmem, size = 0x1000, scoped, tag = 'output window, operand 0, single buffered']
    %9 = vsyncpa [#allocation4], 0
    %10 = vsyncpa [#allocation7], 0
    %11 = vsyncpa [#allocation5], 0
    // Predicated region
    $region2: #{tpu_custom_call.1} parent=1 // pred_check
      _
    $region3: #{tpu_custom_call.1} parent=1 // pred_check_branch
      %13 = sbr.rel (0) target = $region5
    $region4: #{tpu_custom_call.1} parent=1 // pred_region
      %s15 = ssub.s32 64, 64
      %16 = vsyncadd [#allocation4], %s15
      %s18 = sshll.u32 [#allocation3], 4
      %s19 = int_to_ptr.vmem [resolvable:$true] %s18
      %21 = dma.hbm_to_vmem [thread:$0]  %s0, 64, %s19, [#allocation4]
    $region5: #{tpu_custom_call.1} parent=1 // pred_fallthru
      _
    // Predicated region
    $region6: #{tpu_custom_call.1} parent=1 // pred_check
      _
    $region7: #{tpu_custom_call.1} parent=1 // pred_check_branch
      %23 = sbr.rel (0) target = $region9
    $region8: #{tpu_custom_call.1} parent=1 // pred_region
      %s25 = ssub.s32 128, 128
      %26 = vsyncadd [#allocation7], %s25
      %s27 = sshll.u32 [#allocation6], 4
      %s28 = int_to_ptr.vmem [resolvable:$true] %s27
      %33 = dma.hbm_to_vmem [thread:$0]  %s1, 128, %s28, [#allocation7], 64, 64, 4
    $region9: #{tpu_custom_call.1} parent=1 // pred_fallthru
      _
    // Predicated region
    $region10: #{tpu_custom_call.1} parent=1 // pred_check
      _
    $region11: #{tpu_custom_call.1} parent=1 // pred_check_branch
      %35 = sbr.rel (0) target = $region13
    $region12: #{tpu_custom_call.1} parent=1 // pred_region
      _
    $region13: #{tpu_custom_call.1} parent=1 // pred_fallthru
      _
    // Predicated region
    $region14: #{tpu_custom_call.1} parent=1 // pred_check
      _
    $region15: #{tpu_custom_call.1} parent=1 // pred_check_branch
      %37 = sbr.rel (0) target = $region17
    $region16: #{tpu_custom_call.1} parent=1 // pred_region
      _
    $region17: #{tpu_custom_call.1} parent=1 // pred_fallthru
      _
    // Predicated region
    $region18: #{tpu_custom_call.1} parent=1 // pred_check
      _
    $region19: #{tpu_custom_call.1} parent=1 // pred_check_branch
      %39 = sbr.rel (0) target = $region21
    $region20: #{tpu_custom_call.1} parent=1 // pred_region
      %40 = dma.done [#allocation4], 64
    $region21: #{tpu_custom_call.1} parent=1 // pred_fallthru
      _
    // Predicated region
    $region22: #{tpu_custom_call.1} parent=1 // pred_check
      _
    $region23: #{tpu_custom_call.1} parent=1 // pred_check_branch
      %42 = sbr.rel (0) target = $region25
    $region24: #{tpu_custom_call.1} parent=1 // pred_region
      %43 = dma.done [#allocation7], 128
    $region25: #{tpu_custom_call.1} parent=1 // pred_fallthru
      _
    %p45 = scmp.eq.s32.totalorder 0, 0
    // Predicated region
    $region26: #{tpu_custom_call.1} parent=1 // pred_check
      %p46 = pneg %p45
    $region27: #{tpu_custom_call.1} parent=1 // pred_check_branch
      %48 = sbr.rel (%p46) target = $region29
    $region28: #{tpu_custom_call.1} parent=1 // pred_region
      %vm49 = vcmask 130048
      %50 = vst.msk [vmem:[#allocation2] sm:$0xff] %vm49, 0.0
    $region29: #{tpu_custom_call.1} parent=1 // pred_fallthru
      _
    %v51 = vld [vmem:[#allocation2] sm:$0xff]
    %v52 = vld [vmem:[%s2] sm:$0xf]
    %v53 = vld [vmem:[#allocation3] sm:$0xf]
    %vm54 = vcmask 64512
    %v56 = vsel %vm54, %v52, 0
    %vm58 = vcmask 1043456
    %v60 = vsel %vm58, %v53, 0
    %62 = vmatprep.subr.bf16.mxu0 0
    %63 = vmatpush1.bf16.msra.mxu0 %v60
    %64 = vmatprep.subr.bf16.mxu0 0
    %65 = vmatpush1.bf16.msra.mxu0 0
    %66 = vmatprep.subr.bf16.mxu0 0
    %67 = vmatpush1.bf16.msra.mxu0 0
    %68 = vmatprep.subr.bf16.mxu0 0
    %69 = vmatpush1.bf16.msra.mxu0 0
    %70 = vmatprep.subr.bf16.mxu0 0
    %71 = vmatpush1.bf16.msra.mxu0 0
    %72 = vmatprep.subr.bf16.mxu0 0
    %73 = vmatpush1.bf16.msra.mxu0 0
    %74 = vmatprep.subr.bf16.mxu0 0
    %75 = vmatpush1.bf16.msra.mxu0 0
    %76 = vmatprep.subr.bf16.mxu0 0
    %77 = vmatpush1.bf16.msra.mxu0 0
    %78 = vmatprep.subr.bf16.mxu0 0
    %79 = vmatpush1.bf16.msra.mxu0 0
    %80 = vmatprep.subr.bf16.mxu0 0
    %81 = vmatpush1.bf16.msra.mxu0 0
    %82 = vmatprep.subr.bf16.mxu0 0
    %83 = vmatpush1.bf16.msra.mxu0 0
    %84 = vmatprep.subr.bf16.mxu0 0
    %85 = vmatpush1.bf16.msra.mxu0 0
    %86 = vmatprep.subr.bf16.mxu0 0
    %87 = vmatpush1.bf16.msra.mxu0 0
    %88 = vmatprep.subr.bf16.mxu0 0
    %89 = vmatpush1.bf16.msra.mxu0 0
    %90 = vmatprep.subr.bf16.mxu0 0
    %91 = vmatpush1.bf16.msra.mxu0 0
    %92 = vmatprep.subr.bf16.mxu0 0
    %93 = vmatpush1.bf16.msra.mxu0 0
    %94 = vmatprep.mubr.bf16.mxu0 0
    %95 = vmatmul.mubr.bf16.gmra.mrb[0].mxu0 %v56
    %v96 = vpop.f32.mrb[0].mxu0
    %v97 = vadd.f32 0.0, %v96
    %v98 = vpop.f32.mrb[0].mxu0
    %v99 = vpop.f32.mrb[0].mxu0
    %v100 = vpop.f32.mrb[0].mxu0
    %101 = vdwg.mxu0
    %v102 = vadd.f32 %v51, %v97
    %vm103 = vcmask 130048
    %104 = vst.msk [vmem:[#allocation2] sm:$0xff] %vm103, %v102
    // Predicated region
    $region30: #{tpu_custom_call.1} parent=1 // pred_check
      %p105 = pneg %p45
    $region31: #{tpu_custom_call.1} parent=1 // pred_check_branch
      %107 = sbr.rel (%p105) target = $region33
    $region32: #{tpu_custom_call.1} parent=1 // pred_region
      %v108 = vld [vmem:[#allocation2] sm:$0xff]
      %v109 = vpack.c.bf16 %v108, %v108
      %v110 = vld [vmem:[#allocation6] sm:$0xf]
      %v111 = vld [vmem:[#allocation6 + $0x4] sm:$0xf]
      %v112 = vld [vmem:[%s3] sm:$0x1]
      %v114 = vlaneseq
      %v115 = vshrl.u32 %v114, 7
      %v116 = vsub.s32 0, %v115
      %v117 = vrot.slane %v112, %v116
      %v121 = vunpack.c.l.b16 %v110
      %v122 = vunpack.c.l.b16 %v111
      %v123 = vpack.c.b16 %v122, %v121
      %v126 = vsel %vm103, %v109, 0
      %128 = vmatprep.subr.bf16.mxu0 0
      %129 = vmatpush1.bf16.msra.mxu0 %v123
      %130 = vmatprep.subr.bf16.mxu0 0
      %131 = vmatpush1.bf16.msra.mxu0 0
      %132 = vmatprep.subr.bf16.mxu0 0
      %133 = vmatpush1.bf16.msra.mxu0 0
      %134 = vmatprep.subr.bf16.mxu0 0
      %135 = vmatpush1.bf16.msra.mxu0 0
      %136 = vmatprep.subr.bf16.mxu0 0
      %137 = vmatpush1.bf16.msra.mxu0 0
      %138 = vmatprep.subr.bf16.mxu0 0
      %139 = vmatpush1.bf16.msra.mxu0 0
      %140 = vmatprep.subr.bf16.mxu0 0
      %141 = vmatpush1.bf16.msra.mxu0 0
      %142 = vmatprep.subr.bf16.mxu0 0
      %143 = vmatpush1.bf16.msra.mxu0 0
      %144 = vmatprep.subr.bf16.mxu0 0
      %145 = vmatpush1.bf16.msra.mxu0 0
      %146 = vmatprep.subr.bf16.mxu0 0
      %147 = vmatpush1.bf16.msra.mxu0 0
      %148 = vmatprep.subr.bf16.mxu0 0
      %149 = vmatpush1.bf16.msra.mxu0 0
      %150 = vmatprep.subr.bf16.mxu0 0
      %151 = vmatpush1.bf16.msra.mxu0 0
      %152 = vmatprep.subr.bf16.mxu0 0
      %153 = vmatpush1.bf16.msra.mxu0 0
      %154 = vmatprep.subr.bf16.mxu0 0
      %155 = vmatpush1.bf16.msra.mxu0 0
      %156 = vmatprep.subr.bf16.mxu0 0
      %157 = vmatpush1.bf16.msra.mxu0 0
      %158 = vmatprep.subr.bf16.mxu0 0
      %159 = vmatpush1.bf16.msra.mxu0 0
      %160 = vmatprep.mubr.bf16.mxu0 0
      %161 = vmatmul.mubr.bf16.gmra.mrb[0].mxu0 %v126
      %v162 = vpop.f32.mrb[0].mxu0
      %v163 = vadd.f32 %v117, %v162
      %v164 = vpop.f32.mrb[0].mxu0
      %v165 = vpop.f32.mrb[0].mxu0
      %v166 = vpop.f32.mrb[0].mxu0
      %167 = vdwg.mxu0
      %v168 = vmax.f32 %v163, 0.0
      %vm169 = vcmask 261120
      %170 = vst.msk [vmem:[#allocation8] sm:$0xff] %vm169, %v168
    $region33: #{tpu_custom_call.1} parent=1 // pred_fallthru
      _
    // Predicated region
    $region34: #{tpu_custom_call.1} parent=1 // pred_check
      _
    $region35: #{tpu_custom_call.1} parent=1 // pred_check_branch
      %172 = sbr.rel (0) target = $region37
    $region36: #{tpu_custom_call.1} parent=1 // pred_region
      %s174 = ssub.s32 128, 128
      %175 = vsyncadd [#allocation5], %s174
      %s177 = sshll.u32 [#allocation8], 4
      %s178 = int_to_ptr.vmem [resolvable:$true] %s177
      %180 = dma.vmem_to_hbm [thread:$0]  %s178, 128, %s4, [#allocation5]
    $region37: #{tpu_custom_call.1} parent=1 // pred_fallthru
      _
    // Predicated region
    $region38: #{tpu_custom_call.1} parent=1 // pred_check
      _
    $region39: #{tpu_custom_call.1} parent=1 // pred_check_branch
      %182 = sbr.rel (0) target = $region41
    $region40: #{tpu_custom_call.1} parent=1 // pred_region
      %183 = dma.done [#allocation5], 128
    $region41: #{tpu_custom_call.1} parent=1 // pred_fallthru
      _
    %184 = vsyncpa [#allocation4], 1
    %185 = vsyncpa [#allocation7], 1
    %186 = vsyncpa [#allocation5], 1

</llo_original>
